<compile_context>
chip_gen: v7x
topology: tpu7x:2x2x1
jax: 0.10.0
libtpu: 0.0.40
codegen_flags: <defaults>
</compile_context>

<pallas_src>
import functools

import jax
import jax.numpy as jnp
from jax import lax
from jax.experimental import pallas as pl
from jax.experimental.pallas import tpu as pltpu


def _make_kernel(cq, with_attn):
    """Builds the kernel body. cq = query/key channels, with_attn = store attention."""

    def kernel(gamma_ref, w_ref, b_ref, x_ref, out_ref, *rest):
        attn_ref = rest[0] if with_attn else None

        gamma = gamma_ref[0]          # scalar from SMEM
        w = w_ref[...]                # (Oall, C) fused [Wq; Wk; Wv] — hoisted out of loop
        bias = b_ref[...]             # (Oall, 1)
        bblk = x_ref.shape[0]

        # Static unroll over the batch elements packed into this grid step.
        for b in range(bblk):
            x_b = x_ref[b].astype(jnp.float32)                        # (C, T)

            # Fused 1x1-conv projections: one canonical MXU matmul (Oall, C) @ (C, T).
            proj = lax.dot_general(
                w, x_b, (((1,), (0,)), ((), ())),
                preferred_element_type=jnp.float32) + bias            # (Oall, T)
            q = proj[:cq, :]                                          # (Cq, T)
            k = proj[cq:2 * cq, :]                                    # (Cq, T)
            v = proj[2 * cq:, :]                                      # (C,  T)

            # energy[i, j] = <q[:, i], k[:, j]> — contraction expressed via
            # dot_general so the MXU handles operand orientation (no .T / XLU).
            energy = lax.dot_general(
                q, k, (((0,), (0,)), ((), ())),
                preferred_element_type=jnp.float32)                   # (T, T)

            # Numerically-stable softmax over the last dim.
            m = jnp.max(energy, axis=-1, keepdims=True)
            p = jnp.exp(energy - m)
            denom = jnp.sum(p, axis=-1, keepdims=True)                # (T, 1)
            # Divide only the small (T, 1) vector; the T*T-sized op is a multiply.
            attn = p * (1.0 / denom)                                  # (T, T)

            if with_attn:
                attn_ref[b] = attn.astype(attn_ref.dtype)

            # out[c, i] = sum_j v[c, j] * attn[i, j]
            out = lax.dot_general(
                v, attn, (((1,), (1,)), ((), ())),
                preferred_element_type=jnp.float32)                   # (C, T)

            out_ref[b] = (gamma * out + x_b).astype(out_ref.dtype)

    return kernel


def module_self_attention(x, params, *, return_attn=False, bblk=None):
    """x: (B, C, T) float32. params: dict of gamma, wq, bq, wk, bk, wv, bv.

    Matches ModuleSelfAttention.forward (1x1-conv Q/K/V, softmax attention over T,
    residual gamma*out + x). `base` of the original module has no effect here.
    """
    B, C, T = x.shape
    cq = params["wq"].shape[0]
    oall = 2 * cq + C

    # Fuse the three 1x1-conv projections into a single (Oall, C) weight / (Oall, 1) bias.
    w_all = jnp.concatenate([params["wq"], params["wk"], params["wv"]], axis=0)
    b_all = jnp.concatenate([params["bq"], params["bk"], params["bv"]], axis=0)
    gamma = params["gamma"].reshape((1,)).astype(jnp.float32)

    if bblk is None:
        # Pack several batch elements per grid step (amortizes per-step pipeline
        # overhead), bounded by a rough f32 working-set budget and an unroll cap.
        per_b = 4 * (6 * C * T + 4 * T * T + 2 * oall * T)
        vmem_cap = max(1, (4 * 1024 * 1024) // max(per_b, 1))
        bblk = max(1, min(B, 8, vmem_cap))
        if B > 1:  # keep >= 2 grid steps so both v7x TensorCores get work
            bblk = min(bblk, max(1, B // 2))
        while B % bblk:
            bblk -= 1
    assert B % bblk == 0

    grid = (B // bblk,)

    in_specs = [
        pl.BlockSpec(memory_space=pltpu.MemorySpace.SMEM),      # gamma: scalar in SMEM
        pl.BlockSpec((oall, C), lambda i: (0, 0)),              # fused weights (constant)
        pl.BlockSpec((oall, 1), lambda i: (0, 0)),              # fused biases  (constant)
        pl.BlockSpec((bblk, C, T), lambda i: (i, 0, 0)),        # x
    ]

    if return_attn:
        out_shape = (
            jax.ShapeDtypeStruct((B, C, T), x.dtype),
            jax.ShapeDtypeStruct((B, T, T), jnp.float32),
        )
        out_specs = (
            pl.BlockSpec((bblk, C, T), lambda i: (i, 0, 0)),
            pl.BlockSpec((bblk, T, T), lambda i: (i, 0, 0)),
        )
    else:
        out_shape = jax.ShapeDtypeStruct((B, C, T), x.dtype)
        out_specs = pl.BlockSpec((bblk, C, T), lambda i: (i, 0, 0))

    fn = pl.pallas_call(
        _make_kernel(cq, return_attn),
        out_shape=out_shape,
        grid_spec=pltpu.PrefetchScalarGridSpec(
            num_scalar_prefetch=0,
            grid=grid,
            in_specs=in_specs,
            out_specs=out_specs,
        ),
        compiler_params=pltpu.CompilerParams(
            dimension_semantics=("parallel",)),
    )

    res = fn(gamma, w_all, b_all, x)
    if return_attn:
        out, attn = res
        return out, attn
    return res


def _reference(x, params):
    """Pure-JAX reference of the PyTorch forward."""
    q = jnp.einsum("oc,bct->bot", params["wq"], x) + params["bq"][None]   # (B, Cq, T)
    k = jnp.einsum("oc,bct->bot", params["wk"], x) + params["bk"][None]   # (B, Cq, T)
    v = jnp.einsum("oc,bct->bot", params["wv"], x) + params["bv"][None]   # (B, C,  T)
    energy = jnp.einsum("bci,bcj->bij", q, k)                             # (B, T, T)
    attn = jax.nn.softmax(energy, axis=-1)
    out = jnp.einsum("bcj,bij->bci", v, attn)                             # (B, C, T)
    gamma = params["gamma"][0]
    return gamma * out + x, attn


def init_params(key, in_dim, k=8):
    cq = in_dim // k
    ks = jax.random.split(key, 6)
    scale = 1.0 / jnp.sqrt(in_dim)
    return {
        # gamma is initialized to zero in the module's __init__.
        "gamma": jnp.zeros((1,), jnp.float32),
        "wq": jax.random.normal(ks[0], (cq, in_dim), jnp.float32) * scale,
        "bq": jax.random.normal(ks[1], (cq, 1), jnp.float32) * scale,
        "wk": jax.random.normal(ks[2], (cq, in_dim), jnp.float32) * scale,
        "bk": jax.random.normal(ks[3], (cq, 1), jnp.float32) * scale,
        "wv": jax.random.normal(ks[4], (in_dim, in_dim), jnp.float32) * scale,
        "bv": jax.random.normal(ks[5], (in_dim, 1), jnp.float32) * scale,
    }


if __name__ == "__main__":
    B, C, T = 2, 32, 16       # in_dim=32, k=8 -> query/key channels Cq=4
    key = jax.random.PRNGKey(0)
    kx, kp = jax.random.split(key)
    x = jax.random.normal(kx, (B, C, T), jnp.float32)

    params = init_params(kp, C, k=8)
    # gamma is zero-initialized in the module; use a nonzero value here so the
    # attention branch actually contributes to `out` in the check.
    params = dict(params, gamma=jnp.array([0.37], jnp.float32))

    out_ref, attn_ref = _reference(x, params)

    # Default path (matches the PyTorch default): no attention writeback.
    out_only = jax.jit(module_self_attention)(x, params)
    out_only = jax.block_until_ready(out_only)
    assert out_only.shape == (B, C, T)
    assert jnp.allclose(out_only, out_ref, atol=1e-5, rtol=1e-5)

    # return_attn=True path.
    out, attn = jax.jit(functools.partial(module_self_attention, return_attn=True))(x, params)
    out = jax.block_until_ready(out)
    attn = jax.block_until_ready(attn)
    assert jnp.allclose(out, out_ref, atol=1e-5, rtol=1e-5)
    assert jnp.allclose(attn, attn_ref, atol=1e-5, rtol=1e-5)

    print("KERNEL_OK")
</pallas_src>

<mosaic_0001>
module attributes {stable_mosaic.version = 11 : i64} {
  func.func @kernel(%arg0: i32, %arg1: memref<1xf32, #tpu.memory_space<smem>>, %arg2: memref<40x32xf32, #tpu.memory_space<vmem>>, %arg3: memref<40x1xf32, #tpu.memory_space<vmem>>, %arg4: memref<1x32x16xf32, #tpu.memory_space<vmem>>, %arg5: memref<1x32x16xf32, #tpu.memory_space<vmem>>) attributes {dimension_semantics = [#tpu.dimension_semantics<parallel>], iteration_bounds = array<i64: 2>, scalar_prefetch = 0 : i64, scratch_operands = 0 : i64, tpu.core_type = #tpu.core_type<tc>, window_params = [{transform_indices = @transform_0, window_bounds = array<i64: 1>}, {pipeline_mode = #tpu.pipeline_mode<synchronous>, transform_indices = @transform_1, window_bounds = array<i64: 40, 32>}, {pipeline_mode = #tpu.pipeline_mode<synchronous>, transform_indices = @transform_2, window_bounds = array<i64: 40, 1>}, {transform_indices = @transform_3, window_bounds = array<i64: 1, 32, 16>}, {transform_indices = @transform_4, window_bounds = array<i64: 1, 32, 16>}]} {
    %c0 = arith.constant 0 : index
    %0 = memref.load %arg1[%c0] : memref<1xf32, #tpu.memory_space<smem>>
    %c0_0 = arith.constant 0 : index
    %c0_1 = arith.constant 0 : index
    %1 = vector.load %arg2[%c0_0, %c0_1] : memref<40x32xf32, #tpu.memory_space<vmem>>, vector<40x32xf32>
    %c0_2 = arith.constant 0 : index
    %c0_3 = arith.constant 0 : index
    %2 = vector.load %arg3[%c0_2, %c0_3] : memref<40x1xf32, #tpu.memory_space<vmem>>, vector<40x1xf32>
    %c0_4 = arith.constant 0 : index
    %c0_5 = arith.constant 0 : index
    %c0_6 = arith.constant 0 : index
    %3 = vector.load %arg4[%c0_4, %c0_5, %c0_6] : memref<1x32x16xf32, #tpu.memory_space<vmem>>, vector<1x32x16xf32>
    %4 = vector.shape_cast %3 : vector<1x32x16xf32> to vector<32x16xf32>
    %cst = arith.constant dense<0.000000e+00> : vector<40x16xf32>
    %5 = tpu.matmul %1, %4, %cst {dimension_numbers = #tpu.dot_dimension_numbers<[1], [0], [0], [1], [0, 0, 1, 1], [], []>} : vector<40x32xf32>, vector<32x16xf32>, vector<40x16xf32> -> vector<40x16xf32>
    %6 = vector.broadcast %2 : vector<40x1xf32> to vector<40x16xf32>
    %7 = arith.addf %5, %6 : vector<40x16xf32>
    %8 = vector.extract_strided_slice %7 {offsets = [0, 0], sizes = [4, 16], strides = [1, 1]} : vector<40x16xf32> to vector<4x16xf32>
    %9 = vector.extract_strided_slice %7 {offsets = [4, 0], sizes = [4, 16], strides = [1, 1]} : vector<40x16xf32> to vector<4x16xf32>
    %10 = vector.extract_strided_slice %7 {offsets = [8, 0], sizes = [32, 16], strides = [1, 1]} : vector<40x16xf32> to vector<32x16xf32>
    %cst_7 = arith.constant dense<0.000000e+00> : vector<16x16xf32>
    %11 = tpu.matmul %8, %9, %cst_7 {dimension_numbers = #tpu.dot_dimension_numbers<[0], [0], [1], [1], [0, 1, 1, 1], [], []>} : vector<4x16xf32>, vector<4x16xf32>, vector<16x16xf32> -> vector<16x16xf32>
    %cst_8 = arith.constant dense<0xFF800000> : vector<16xf32>
    %12 = vector.multi_reduction <maximumf>, %11, %cst_8 [1] : vector<16x16xf32> to vector<16xf32>
    %13 = vector.shape_cast %12 : vector<16xf32> to vector<16x1xf32>
    %14 = vector.broadcast %13 : vector<16x1xf32> to vector<16x16xf32>
    %15 = arith.subf %11, %14 : vector<16x16xf32>
    %16 = math.exp %15 : vector<16x16xf32>
    %cst_9 = arith.constant dense<0.000000e+00> : vector<16xf32>
    %17 = vector.multi_reduction <add>, %16, %cst_9 [1] : vector<16x16xf32> to vector<16xf32>
    %18 = vector.shape_cast %17 : vector<16xf32> to vector<16x1xf32>
    %cst_10 = arith.constant 1.000000e+00 : f32
    %19 = vector.broadcast %cst_10 : f32 to vector<16x1xf32>
    %20 = arith.divf %19, %18 : vector<16x1xf32>
    %21 = vector.broadcast %20 : vector<16x1xf32> to vector<16x16xf32>
    %22 = arith.mulf %16, %21 : vector<16x16xf32>
    %cst_11 = arith.constant dense<0.000000e+00> : vector<32x16xf32>
    %23 = tpu.matmul %10, %22, %cst_11 {dimension_numbers = #tpu.dot_dimension_numbers<[1], [1], [0], [0], [0, 0, 1, 0], [], []>} : vector<32x16xf32>, vector<16x16xf32>, vector<32x16xf32> -> vector<32x16xf32>
    %24 = vector.broadcast %0 : f32 to vector<32x16xf32>
    %25 = arith.mulf %24, %23 : vector<32x16xf32>
    %26 = arith.addf %25, %4 : vector<32x16xf32>
    %c0_12 = arith.constant 0 : index
    %c0_13 = arith.constant 0 : index
    %c0_14 = arith.constant 0 : index
    %27 = vector.load %arg5[%c0_12, %c0_13, %c0_14] : memref<1x32x16xf32, #tpu.memory_space<vmem>>, vector<1x32x16xf32>
    %28 = vector.shape_cast %27 : vector<1x32x16xf32> to vector<32x16xf32>
    %29 = vector.shape_cast %26 : vector<32x16xf32> to vector<1x32x16xf32>
    tpu.vector_store %arg5[%c0_12, %c0_13, %c0_14], %29 {strides = array<i32>} : memref<1x32x16xf32, #tpu.memory_space<vmem>>, vector<1x32x16xf32>,
    return
  }
  func.func @transform_0(%arg0: i32) -> i32 {
    %c0_i32 = arith.constant 0 : i32
    %c0_i32_0 = arith.constant 0 : i32
    return %c0_i32 : i32
  }
  func.func @transform_1(%arg0: i32) -> (i32, i32) {
    %c0_i32 = arith.constant 0 : i32
    %c0_i32_0 = arith.constant 0 : i32
    %c0_i32_1 = arith.constant 0 : i32
    return %c0_i32, %c0_i32_0 : i32, i32
  }
  func.func @transform_2(%arg0: i32) -> (i32, i32) {
    %c0_i32 = arith.constant 0 : i32
    %c0_i32_0 = arith.constant 0 : i32
    %c0_i32_1 = arith.constant 0 : i32
    return %c0_i32, %c0_i32_0 : i32, i32
  }
  func.func @transform_3(%arg0: i32) -> (i32, i32, i32) {
    %c0_i32 = arith.constant 0 : i32
    %c0_i32_0 = arith.constant 0 : i32
    %c0_i32_1 = arith.constant 0 : i32
    return %arg0, %c0_i32, %c0_i32_0 : i32, i32, i32
  }
  func.func @transform_4(%arg0: i32) -> (i32, i32, i32) {
    %c0_i32 = arith.constant 0 : i32
    %c0_i32_0 = arith.constant 0 : i32
    %c0_i32_1 = arith.constant 0 : i32
    return %arg0, %c0_i32, %c0_i32_0 : i32, i32, i32
  }
}

</mosaic_0001>

<llo_original>
// kernel: module_self_attention.1
$region0: #{module_self_attention.1}
  #allocation0 [shape = 'u32[]', space=smem, size = 0x4, offset = 0x4, fixed_abs, tag = 'smem constant byte address 0x4 - core index']
  #allocation1 [shape = 'u32[144,128]{1,0:T(1,128)}', space=vmem, size = 0x12000, scoped, tag = 'internal scratch']
  #allocation2 [shape = 'f32[1]{0:T(128)S(6)}', space=smem, size = 0x200, scoped, tag = 'scoped memory for module_self_attention.1']
  %s0 = inlined_call_operand.<no memory space> [shape: f32[1], index: 0, kind: input, shape index: {}]
  %s1 = inlined_call_operand.vmem [shape: f32[40,32], index: 1, kind: input, shape index: {}]
  %s2 = inlined_call_operand.vmem [shape: f32[40,1], index: 2, kind: input, shape index: {}]
  %s3 = inlined_call_operand.vmem [shape: f32[2,32,16], index: 3, kind: input, shape index: {}]
  %s4 = inlined_call_operand.vmem [shape: f32[2,32,16], index: 4, kind: output, shape index: {}]
  %s5 = sld [smem:[#allocation0]]
  $region49: #{module_self_attention.1} parent=0
    _
  %s7 = ssub.s32 1, %s5
  %s8 = scalar_select 0, %s7, %s5
  %9 = sst [smem:[#allocation2]] %s0
  loop: start=0, step=1, limit=4
  $region2: #{module_self_attention.1} parent=0 // loop_pre_header
    _
  $region3: #{module_self_attention.1} parent=0 // loop_header
    %s11 = sphi 0, %s15
    %p12 = scmp.ge.s32.totalorder %s11, 4
    %s19 = sphi 0, %s19
    %s21 = sphi 0, %s19
    %s22 = sphi 0, %s21
    %s36 = sphi 0, %s22
    %s40 = sphi 0, %s40
    %s42 = sphi 0, %s40
    %s43 = sphi 0, %s42
    %s57 = sphi 0, %s43
    %s61 = sphi 0, %s61
    %s63 = sphi 0, %s61
    %s64 = sphi 0, %s63
    %s78 = sphi 0, %s64
    %s84 = sphi 0, %s86
    %s87 = sphi 0, %s84
    %s88 = sphi 0, %s87
    %s104 = sphi 0, %s88
    %s110 = sphi 0, %s112
    %s113 = sphi 0, %s110
    %s114 = sphi 0, %s113
    %s130 = sphi 0, %s114
  $region4: #{module_self_attention.1} parent=0 // loop_header_branch
    %14 = sbr.rel (%p12) target = $region8
  $region5: #{module_self_attention.1} parent=0 // loop_body
    %s16 = ssub.s32 %s11, 1
    %s17 = ssub.s32 %s11, 2
    %s18 = sadd.s32 %s11, 1
    %s20 = sadd.s32 %s19, 1
    %p23 = scmp.eq.s32.totalorder %s11, 1
    %p24 = scmp.ne.s32.totalorder %s19, %s21
    %p25 = scmp.eq.s32.totalorder %s11, 0
    %p26 = por %p24, %p25
    %p27 = scmp.ne.s32.totalorder %s19, %s21
    %p28 = scmp.eq.s32.totalorder %s16, 1
    %p29 = por %p27, %p28
    %p30 = scmp.ne.s32.totalorder %s21, %s22
    %p31 = scmp.eq.s32.totalorder %s16, 0
    %p32 = por %p30, %p31
    %p33 = scmp.ne.s32.totalorder %s21, %s22
    %p34 = scmp.eq.s32.totalorder %s17, 1
    %p35 = por %p33, %p34
    %p37 = scmp.ne.s32.totalorder %s22, %s36
    %p38 = scmp.eq.s32.totalorder %s17, 0
    %p39 = por %p37, %p38
    %s41 = sadd.s32 %s40, 1
    %p44 = scmp.eq.s32.totalorder %s11, 1
    %p45 = scmp.ne.s32.totalorder %s40, %s42
    %p46 = scmp.eq.s32.totalorder %s11, 0
    %p47 = por %p45, %p46
    %p48 = scmp.ne.s32.totalorder %s40, %s42
    %p49 = scmp.eq.s32.totalorder %s16, 1
    %p50 = por %p48, %p49
    %p51 = scmp.ne.s32.totalorder %s42, %s43
    %p52 = scmp.eq.s32.totalorder %s16, 0
    %p53 = por %p51, %p52
    %p54 = scmp.ne.s32.totalorder %s42, %s43
    %p55 = scmp.eq.s32.totalorder %s17, 1
    %p56 = por %p54, %p55
    %p58 = scmp.ne.s32.totalorder %s43, %s57
    %p59 = scmp.eq.s32.totalorder %s17, 0
    %p60 = por %p58, %p59
    %s62 = sadd.s32 %s61, 1
    %p65 = scmp.eq.s32.totalorder %s11, 1
    %p66 = scmp.ne.s32.totalorder %s61, %s63
    %p67 = scmp.eq.s32.totalorder %s11, 0
    %p68 = por %p66, %p67
    %p69 = scmp.ne.s32.totalorder %s61, %s63
    %p70 = scmp.eq.s32.totalorder %s16, 1
    %p71 = por %p69, %p70
    %p72 = scmp.ne.s32.totalorder %s63, %s64
    %p73 = scmp.eq.s32.totalorder %s16, 0
    %p74 = por %p72, %p73
    %p75 = scmp.ne.s32.totalorder %s63, %s64
    %p76 = scmp.eq.s32.totalorder %s17, 1
    %p77 = por %p75, %p76
    %p79 = scmp.ne.s32.totalorder %s64, %s78
    %p80 = scmp.eq.s32.totalorder %s17, 0
    %p81 = por %p79, %p80
    %s82 = ssub.s32 %s11, %s18
    %p83 = scmp.eq.s32.totalorder %s82, 0
    %s85 = sadd.s32 %s84, 1
    %s86 = scalar_select %p83, %s84, %s85
    %p89 = pneg %p83
    %p90 = scmp.eq.s32.totalorder %s11, 1
    %p91 = por %p89, %p90
    %p92 = scmp.ne.s32.totalorder %s84, %s87
    %p93 = scmp.eq.s32.totalorder %s11, 0
    %p94 = por %p92, %p93
    %p95 = scmp.ne.s32.totalorder %s84, %s87
    %p96 = scmp.eq.s32.totalorder %s16, 1
    %p97 = por %p95, %p96
    %p98 = scmp.ne.s32.totalorder %s87, %s88
    %p99 = scmp.eq.s32.totalorder %s16, 0
    %p100 = por %p98, %p99
    %p101 = scmp.ne.s32.totalorder %s87, %s88
    %p102 = scmp.eq.s32.totalorder %s17, 1
    %p103 = por %p101, %p102
    %p105 = scmp.ne.s32.totalorder %s88, %s104
    %p106 = scmp.eq.s32.totalorder %s17, 0
    %p107 = por %p105, %p106
    %s108 = ssub.s32 %s11, %s18
    %p109 = scmp.eq.s32.totalorder %s108, 0
    %s111 = sadd.s32 %s110, 1
    %s112 = scalar_select %p109, %s110, %s111
    %p115 = pneg %p109
    %p116 = scmp.eq.s32.totalorder %s11, 1
    %p117 = por %p115, %p116
    %p118 = scmp.ne.s32.totalorder %s110, %s113
    %p119 = scmp.eq.s32.totalorder %s11, 0
    %p120 = por %p118, %p119
    %p121 = scmp.ne.s32.totalorder %s110, %s113
    %p122 = scmp.eq.s32.totalorder %s16, 1
    %p123 = por %p121, %p122
    %p124 = scmp.ne.s32.totalorder %s113, %s114
    %p125 = scmp.eq.s32.totalorder %s16, 0
    %p126 = por %p124, %p125
    %p127 = scmp.ne.s32.totalorder %s113, %s114
    %p128 = scmp.eq.s32.totalorder %s17, 1
    %p129 = por %p127, %p128
    %p131 = scmp.ne.s32.totalorder %s114, %s130
    %p132 = scmp.eq.s32.totalorder %s17, 0
    %p133 = por %p131, %p132
    %p134 = scmp.le.s32.totalorder 1, %s11
    %p135 = scmp.lt.s32.totalorder %s11, 3
    %p136 = pnand %p134, %p135
    %p137 = pneg %p136
    // Predicated region
    $region9: #{module_self_attention.1} parent=5 // pred_check
      _
    $region10: #{module_self_attention.1} parent=5 // pred_check_branch
      %139 = sbr.rel (%p136) target = $region12
    $region11: #{module_self_attention.1} parent=5 // pred_region
      %s140 = ssub.s32 %s11, 1
      // Predicated region
      $region13: #{module_self_attention.1} parent=11 // pred_check
        %p141 = pneg %p32
      $region14: #{module_self_attention.1} parent=11 // pred_check_branch
        %143 = sbr.rel (%p141) target = $region16
      $region15: #{module_self_attention.1} parent=11 // pred_region
        _
      $region16: #{module_self_attention.1} parent=11 // pred_fallthru
        _
      // Predicated region
      $region17: #{module_self_attention.1} parent=11 // pred_check
        %p144 = pneg %p53
      $region18: #{module_self_attention.1} parent=11 // pred_check_branch
        %146 = sbr.rel (%p144) target = $region20
      $region19: #{module_self_attention.1} parent=11 // pred_region
        _
      $region20: #{module_self_attention.1} parent=11 // pred_fallthru
        _
      // Predicated region
      $region21: #{module_self_attention.1} parent=11 // pred_check
        %p147 = pneg %p74
      $region22: #{module_self_attention.1} parent=11 // pred_check_branch
        %149 = sbr.rel (%p147) target = $region24
      $region23: #{module_self_attention.1} parent=11 // pred_region
        _
      $region24: #{module_self_attention.1} parent=11 // pred_fallthru
        _
    $region12: #{module_self_attention.1} parent=5 // pred_fallthru
      _
    %p150 = scmp.lt.s32.totalorder %s11, 2
    // Predicated region
    $region25: #{module_self_attention.1} parent=5 // pred_check
      %p151 = pneg %p150
    $region26: #{module_self_attention.1} parent=5 // pred_check_branch
      %153 = sbr.rel (%p151) target = $region28
    $region27: #{module_self_attention.1} parent=5 // pred_region
      // Predicated region
      $region29: #{module_self_attention.1} parent=27 // pred_check
        %p154 = pneg %p94
      $region30: #{module_self_attention.1} parent=27 // pred_check_branch
        %156 = sbr.rel (%p154) target = $region32
      $region31: #{module_self_attention.1} parent=27 // pred_region
        %p157 = scmp.lt.s32.totalorder %s11, 1
        %s158 = scalar_select %p157, %s11, 1
        %s159 = smul.addr %s158, 4
        %s160 = smul.addr %s159, 8
        %s161 = scalar_lea.vmem %s3, %s160
      $region32: #{module_self_attention.1} parent=27 // pred_fallthru
        _
    $region28: #{module_self_attention.1} parent=5 // pred_fallthru
      _
    %p162 = scmp.le.s32.totalorder 1, %s11
    %p163 = scmp.lt.s32.totalorder %s11, 3
    %p164 = pnand %p162, %p163
    %p165 = pneg %p164
    // Predicated region
    $region33: #{module_self_attention.1} parent=5 // pred_check
      _
    $region34: #{module_self_attention.1} parent=5 // pred_check_branch
      %167 = sbr.rel (%p164) target = $region36
    $region35: #{module_self_attention.1} parent=5 // pred_region
      %s168 = ssub.s32 %s11, 1
      %p169 = pneg %p32
      %p170 = pneg %p29
      %p171 = pneg %p53
      %p172 = pneg %p50
      %p173 = pneg %p74
      %p174 = pneg %p71
      %p175 = scmp.lt.s32.totalorder %s16, 1
      %s176 = scalar_select %p175, %s16, 1
      %s177 = smul.addr %s176, 4
      %s178 = smul.addr %s177, 8
      %s179 = scalar_lea.vmem %s3, %s178
      %p180 = pneg %p100
      %p181 = pneg %p97
      %p182 = pneg %p126
      %p183 = pneg %p123
      %p184 = scmp.lt.s32.totalorder %s16, 1
      %s185 = scalar_select %p184, %s16, 1
      %s186 = smul.addr %s185, 4
      %s187 = smul.addr %s186, 8
      %s188 = scalar_lea.vmem %s4, %s187
      %p189 = scmp.lt.s32.totalorder %s16, 1
      %s190 = scalar_select %p189, %s16, 1
      %s191 = smul.addr %s190, 4
      %s192 = smul.addr %s191, 8
      %s193 = scalar_lea.vmem %s3, %s192
      %p194 = scmp.lt.s32.totalorder %s16, 1
      %s195 = scalar_select %p194, %s16, 1
      %s196 = smul.addr %s195, 4
      %s197 = smul.addr %s196, 8
      %s198 = scalar_lea.vmem %s4, %s197
      %s199 = sld [smem:[#allocation2]]
      %v200 = vld [vmem:[%s1] sm:$0xff]
      %v201 = vld [vmem:[%s1 + $0x8] sm:$0xff]
      %v202 = vld [vmem:[%s1 + $0x10] sm:$0xff]
      %v203 = vld [vmem:[%s1 + $0x18] sm:$0xff]
      %v204 = vld [vmem:[%s1 + $0x20] sm:$0xff]
      %v205 = vld [vmem:[%s2] sm:$0xff]
      %v206 = vld [vmem:[%s2 + $0x8] sm:$0xff]
      %v207 = vld [vmem:[%s2 + $0x10] sm:$0xff]
      %v208 = vld [vmem:[%s2 + $0x18] sm:$0xff]
      %v209 = vld [vmem:[%s2 + $0x20] sm:$0xff]
      %v210 = vld [vmem:[%s193] sm:$0xff]
      %v211 = vld [vmem:[%s193 + $0x8] sm:$0xff]
      %v212 = vld [vmem:[%s193 + $0x10] sm:$0xff]
      %v213 = vld [vmem:[%s193 + $0x18] sm:$0xff]
      %215 = vset.pattern.permute.xlu0 0
      %216 = vperm.xlu0 %215, %v205
      %v217 = vpop.permute.xlu0 %216
      %220 = vset.pattern.permute.xlu0 0
      %221 = vperm.xlu0 %220, %v206
      %v222 = vpop.permute.xlu0 %221
      %225 = vset.pattern.permute.xlu0 0
      %226 = vperm.xlu0 %225, %v207
      %v227 = vpop.permute.xlu0 %226
      %230 = vset.pattern.permute.xlu0 0
      %231 = vperm.xlu0 %230, %v208
      %v232 = vpop.permute.xlu0 %231
      %235 = vset.pattern.permute.xlu0 0
      %236 = vperm.xlu0 %235, %v209
      %v237 = vpop.permute.xlu0 %236
      %vm239 = vcmask 261120
      %v241 = vsel %vm239, %v200, 0
      %v244 = vsel %vm239, %v201, 0
      %v247 = vsel %vm239, %v202, 0
      %v250 = vsel %vm239, %v203, 0
      %v253 = vsel %vm239, %v204, 0
      %255 = vmatprep.subr.mxu0 0.0
      %256 = vmatpush1.msra.mxu0 %v210
      %257 = vmatprep.subr.mxu0 0.0
      %258 = vmatpush1.msra.mxu0 %v211
      %259 = vmatprep.subr.mxu0 0.0
      %260 = vmatpush1.msra.mxu0 %v212
      %261 = vmatprep.subr.mxu0 0.0
      %262 = vmatpush1.msra.mxu0 %v213
      %263 = vmatprep.subr.mxu0 0.0
      %264 = vmatpush1.msra.mxu0 0.0
      %265 = vmatprep.subr.mxu0 0.0
      %266 = vmatpush1.msra.mxu0 0.0
      %267 = vmatprep.subr.mxu0 0.0
      %268 = vmatpush1.msra.mxu0 0.0
      %269 = vmatprep.subr.mxu0 0.0
      %270 = vmatpush1.msra.mxu0 0.0
      %271 = vmatprep.subr.mxu0 0.0
      %272 = vmatpush1.msra.mxu0 0.0
      %273 = vmatprep.subr.mxu0 0.0
      %274 = vmatpush1.msra.mxu0 0.0
      %275 = vmatprep.subr.mxu0 0.0
      %276 = vmatpush1.msra.mxu0 0.0
      %277 = vmatprep.subr.mxu0 0.0
      %278 = vmatpush1.msra.mxu0 0.0
      %279 = vmatprep.subr.mxu0 0.0
      %280 = vmatpush1.msra.mxu0 0.0
      %281 = vmatprep.subr.mxu0 0.0
      %282 = vmatpush1.msra.mxu0 0.0
      %283 = vmatprep.subr.mxu0 0.0
      %284 = vmatpush1.msra.mxu0 0.0
      %285 = vmatprep.subr.mxu0 0.0
      %286 = vmatpush1.msra.mxu0 0.0
      %287 = vmatprep.subr.mxu0 0.0
      %288 = vmatpush1.msra.mxu0 0.0
      %289 = vmatprep.subr.mxu0 0.0
      %290 = vmatpush1.msra.mxu0 0.0
      %291 = vmatprep.subr.mxu0 0.0
      %292 = vmatpush1.msra.mxu0 0.0
      %293 = vmatprep.subr.mxu0 0.0
      %294 = vmatpush1.msra.mxu0 0.0
      %295 = vmatprep.subr.mxu0 0.0
      %296 = vmatpush1.msra.mxu0 0.0
      %297 = vmatprep.subr.mxu0 0.0
      %298 = vmatpush1.msra.mxu0 0.0
      %299 = vmatprep.subr.mxu0 0.0
      %300 = vmatpush1.msra.mxu0 0.0
      %301 = vmatprep.subr.mxu0 0.0
      %302 = vmatpush1.msra.mxu0 0.0
      %303 = vmatprep.subr.mxu0 0.0
      %304 = vmatpush1.msra.mxu0 0.0
      %305 = vmatprep.subr.mxu0 0.0
      %306 = vmatpush1.msra.mxu0 0.0
      %307 = vmatprep.subr.mxu0 0.0
      %308 = vmatpush1.msra.mxu0 0.0
      %309 = vmatprep.subr.mxu0 0.0
      %310 = vmatpush1.msra.mxu0 0.0
      %311 = vmatprep.subr.mxu0 0.0
      %312 = vmatpush1.msra.mxu0 0.0
      %313 = vmatprep.subr.mxu0 0.0
      %314 = vmatpush1.msra.mxu0 0.0
      %315 = vmatprep.subr.mxu0 0.0
      %316 = vmatpush1.msra.mxu0 0.0
      %317 = vmatprep.subr.mxu0 0.0
      %318 = vmatpush1.msra.mxu0 0.0
      %319 = vmatprep.mubr.f32.mxu0 0.0
      %320 = vmatmul.mubr.f32.gmra.mrb[0].mxu0 %v241
      %v321 = vpop.f32.mrb[0].mxu0
      %v322 = vadd.f32 %v217, %v321
      %v323 = vpop.f32.mrb[0].mxu0
      %324 = vmatprep.mubr.f32.mxu0 0.0
      %325 = vmatmul.mubr.f32.gmra.mrb[0].mxu0 %v244
      %v326 = vpop.f32.mrb[0].mxu0
      %v327 = vadd.f32 %v222, %v326
      %v328 = vpop.f32.mrb[0].mxu0
      %329 = vmatprep.mubr.f32.mxu0 0.0
      %330 = vmatmul.mubr.f32.gmra.mrb[0].mxu0 %v247
      %v331 = vpop.f32.mrb[0].mxu0
      %v332 = vadd.f32 %v227, %v331
      %v333 = vpop.f32.mrb[0].mxu0
      %334 = vmatprep.mubr.f32.mxu0 0.0
      %335 = vmatmul.mubr.f32.gmra.mrb[0].mxu0 %v250
      %v336 = vpop.f32.mrb[0].mxu0
      %v337 = vadd.f32 %v232, %v336
      %v338 = vpop.f32.mrb[0].mxu0
      %339 = vmatprep.mubr.f32.mxu0 0.0
      %340 = vmatmul.mubr.f32.gmra.mrb[0].mxu0 %v253
      %v341 = vpop.f32.mrb[0].mxu0
      %v342 = vadd.f32 %v237, %v341
      %v343 = vpop.f32.mrb[0].mxu0
      %344 = vdwg.mxu0
      %345 = vxpose.xlu0.b32.start [1/16] %v322, 128
      %346 = vxpose.xlu0.b32.cont [2/16] 0.0, 128
      %347 = vxpose.xlu0.b32.cont [3/16] 0.0, 128
      %348 = vxpose.xlu0.b32.cont [4/16] 0.0, 128
      %349 = vxpose.xlu0.b32.cont [5/16] 0.0, 128
      %350 = vxpose.xlu0.b32.cont [6/16] 0.0, 128
      %351 = vxpose.xlu0.b32.cont [7/16] 0.0, 128
      %352 = vxpose.xlu0.b32.cont [8/16] 0.0, 128
      %353 = vxpose.xlu0.b32.cont [9/16] 0.0, 128
      %354 = vxpose.xlu0.b32.cont [10/16] 0.0, 128
      %355 = vxpose.xlu0.b32.cont [11/16] 0.0, 128
      %356 = vxpose.xlu0.b32.cont [12/16] 0.0, 128
      %357 = vxpose.xlu0.b32.cont [13/16] 0.0, 128
      %358 = vxpose.xlu0.b32.cont [14/16] 0.0, 128
      %359 = vxpose.xlu0.b32.cont [15/16] 0.0, 128
      %360 = vxpose.xlu0.b32.end [16/16] 0.0, 128
      %v361 = vpop.trf.xlu0
      %v362 = vpop.trf.xlu0
      %v363 = vpop.trf.xlu0
      %v364 = vpop.trf.xlu0
      %v365 = vpop.trf.xlu0
      %v366 = vpop.trf.xlu0
      %v367 = vpop.trf.xlu0
      %v368 = vpop.trf.xlu0
      %v369 = vpop.trf.xlu0
      %v370 = vpop.trf.xlu0
      %v371 = vpop.trf.xlu0
      %v372 = vpop.trf.xlu0
      %v373 = vpop.trf.xlu0
      %v374 = vpop.trf.xlu0
      %v375 = vpop.trf.xlu0
      %v376 = vpop.trf.xlu0
      %v378 = vrot.slane %v322, 4
      %vm379 = vcmask 31744
      %v381 = vsel %vm379, %v361, 0
      %v384 = vsel %vm379, %v362, 0
      %vm386 = vcmask 1043456
      %v387 = vsel %vm386, %v378, 0
      %389 = vmatprep.subr.mxu0 0.0
      %390 = vmatpush1.msra.mxu0 %v387
      %391 = vmatprep.subr.mxu0 0.0
      %392 = vmatpush1.msra.mxu0 0.0
      %393 = vmatprep.subr.mxu0 0.0
      %394 = vmatpush1.msra.mxu0 0.0
      %395 = vmatprep.subr.mxu0 0.0
      %396 = vmatpush1.msra.mxu0 0.0
      %397 = vmatprep.subr.mxu0 0.0
      %398 = vmatpush1.msra.mxu0 0.0
      %399 = vmatprep.subr.mxu0 0.0
      %400 = vmatpush1.msra.mxu0 0.0
      %401 = vmatprep.subr.mxu0 0.0
      %402 = vmatpush1.msra.mxu0 0.0
      %403 = vmatprep.subr.mxu0 0.0
      %404 = vmatpush1.msra.mxu0 0.0
      %405 = vmatprep.subr.mxu0 0.0
      %406 = vmatpush1.msra.mxu0 0.0
      %407 = vmatprep.subr.mxu0 0.0
      %408 = vmatpush1.msra.mxu0 0.0
      %409 = vmatprep.subr.mxu0 0.0
      %410 = vmatpush1.msra.mxu0 0.0
      %411 = vmatprep.subr.mxu0 0.0
      %412 = vmatpush1.msra.mxu0 0.0
      %413 = vmatprep.subr.mxu0 0.0
      %414 = vmatpush1.msra.mxu0 0.0
      %415 = vmatprep.subr.mxu0 0.0
      %416 = vmatpush1.msra.mxu0 0.0
      %417 = vmatprep.subr.mxu0 0.0
      %418 = vmatpush1.msra.mxu0 0.0
      %419 = vmatprep.subr.mxu0 0.0
      %420 = vmatpush1.msra.mxu0 0.0
      %421 = vmatprep.subr.mxu0 0.0
      %422 = vmatpush1.msra.mxu0 0.0
      %423 = vmatprep.subr.mxu0 0.0
      %424 = vmatpush1.msra.mxu0 0.0
      %425 = vmatprep.subr.mxu0 0.0
      %426 = vmatpush1.msra.mxu0 0.0
      %427 = vmatprep.subr.mxu0 0.0
      %428 = vmatpush1.msra.mxu0 0.0
      %429 = vmatprep.subr.mxu0 0.0
      %430 = vmatpush1.msra.mxu0 0.0
      %431 = vmatprep.subr.mxu0 0.0
      %432 = vmatpush1.msra.mxu0 0.0
      %433 = vmatprep.subr.mxu0 0.0
      %434 = vmatpush1.msra.mxu0 0.0
      %435 = vmatprep.subr.mxu0 0.0
      %436 = vmatpush1.msra.mxu0 0.0
      %437 = vmatprep.subr.mxu0 0.0
      %438 = vmatpush1.msra.mxu0 0.0
      %439 = vmatprep.subr.mxu0 0.0
      %440 = vmatpush1.msra.mxu0 0.0
      %441 = vmatprep.subr.mxu0 0.0
      %442 = vmatpush1.msra.mxu0 0.0
      %443 = vmatprep.subr.mxu0 0.0
      %444 = vmatpush1.msra.mxu0 0.0
      %445 = vmatprep.subr.mxu0 0.0
      %446 = vmatpush1.msra.mxu0 0.0
      %447 = vmatprep.subr.mxu0 0.0
      %448 = vmatpush1.msra.mxu0 0.0
      %449 = vmatprep.subr.mxu0 0.0
      %450 = vmatpush1.msra.mxu0 0.0
      %451 = vmatprep.subr.mxu0 0.0
      %452 = vmatpush1.msra.mxu0 0.0
      %453 = vmatprep.mubr.f32.mxu0 0.0
      %454 = vmatmul.mubr.f32.gmra.mrb[0].mxu0 %v381
      %v455 = vpop.f32.mrb[0].mxu0
      %v456 = vadd.f32 0.0, %v455
      %v457 = vpop.f32.mrb[0].mxu0
      %458 = vmatprep.mubr.f32.mxu0 0.0
      %459 = vmatmul.mubr.f32.gmra.mrb[0].mxu0 %v384
      %v460 = vpop.f32.mrb[0].mxu0
      %v461 = vadd.f32 0.0, %v460
      %v462 = vpop.f32.mrb[0].mxu0
      %463 = vdwg.mxu0
      %vm464 = vcmask 130048
      %v465 = vsel %vm464, %v456, -inf
      %466 = vmax.xlane.f32.xlu0 %v465
      %v467 = vpop.xlane.xlu0 %466
      %v468 = vsel %vm464, %v461, -inf
      %469 = vmax.xlane.f32.xlu0 %v468
      %v470 = vpop.xlane.xlu0 %469
      %v471 = vsub.f32 %v456, %v467
      %v472 = vsub.f32 %v461, %v470
      %v473 = vmul.f32 %v471, 1.442695
      %v474 = vpow.pop %v473
      %v475 = vmul.f32 %v472, 1.442695
      %v476 = vpow.pop %v475
      %v477 = vsel %vm464, %v474, 0.0
      %478 = vadd.xlane.f32.xlu0 %v477
      %v479 = vpop.xlane.xlu0 %478
      %v480 = vsel %vm464, %v476, 0.0
      %481 = vadd.xlane.f32.xlu0 %v480
      %v482 = vpop.xlane.xlu0 %481
      %v483 = vrcp.pop %v479
      %v484 = vmul.f32 1.0, %v483
      %v485 = vrcp.pop %v482
      %v486 = vmul.f32 1.0, %v485
      %v487 = vmul.f32 %v474, %v484
      %v488 = vmul.f32 %v476, %v486
      %v490 = vsel %vm464, %v327, 0
      %v493 = vsel %vm464, %v332, 0
      %v496 = vsel %vm464, %v337, 0
      %v499 = vsel %vm464, %v342, 0
      %v502 = vsel %vm464, %v487, 0
      %v505 = vsel %vm464, %v488, 0
      %507 = vmatprep.subr.mxu0 0.0
      %508 = vmatpush1.xpose.msra.mxu0 %v502
      %509 = vmatprep.subr.mxu0 0.0
      %510 = vmatpush1.xpose.msra.mxu0 %v505
      %511 = vmatprep.subr.mxu0 0.0
      %512 = vmatpush1.xpose.msra.mxu0 0.0
      %513 = vmatprep.subr.mxu0 0.0
      %514 = vmatpush1.xpose.msra.mxu0 0.0
      %515 = vmatprep.subr.mxu0 0.0
      %516 = vmatpush1.xpose.msra.mxu0 0.0
      %517 = vmatprep.subr.mxu0 0.0
      %518 = vmatpush1.xpose.msra.mxu0 0.0
      %519 = vmatprep.subr.mxu0 0.0
      %520 = vmatpush1.xpose.msra.mxu0 0.0
      %521 = vmatprep.subr.mxu0 0.0
      %522 = vmatpush1.xpose.msra.mxu0 0.0
      %523 = vmatprep.subr.mxu0 0.0
      %524 = vmatpush1.xpose.msra.mxu0 0.0
      %525 = vmatprep.subr.mxu0 0.0
      %526 = vmatpush1.xpose.msra.mxu0 0.0
      %527 = vmatprep.subr.mxu0 0.0
      %528 = vmatpush1.xpose.msra.mxu0 0.0
      %529 = vmatprep.subr.mxu0 0.0
      %530 = vmatpush1.xpose.msra.mxu0 0.0
      %531 = vmatprep.subr.mxu0 0.0
      %532 = vmatpush1.xpose.msra.mxu0 0.0
      %533 = vmatprep.subr.mxu0 0.0
      %534 = vmatpush1.xpose.msra.mxu0 0.0
      %535 = vmatprep.subr.mxu0 0.0
      %536 = vmatpush1.xpose.msra.mxu0 0.0
      %537 = vmatprep.subr.mxu0 0.0
      %538 = vmatpush1.xpose.msra.mxu0 0.0
      %539 = vmatprep.subr.mxu0 0.0
      %540 = vmatpush1.xpose.msra.mxu0 0.0
      %541 = vmatprep.subr.mxu0 0.0
      %542 = vmatpush1.xpose.msra.mxu0 0.0
      %543 = vmatprep.subr.mxu0 0.0
      %544 = vmatpush1.xpose.msra.mxu0 0.0
      %545 = vmatprep.subr.mxu0 0.0
      %546 = vmatpush1.xpose.msra.mxu0 0.0
      %547 = vmatprep.subr.mxu0 0.0
      %548 = vmatpush1.xpose.msra.mxu0 0.0
      %549 = vmatprep.subr.mxu0 0.0
      %550 = vmatpush1.xpose.msra.mxu0 0.0
      %551 = vmatprep.subr.mxu0 0.0
      %552 = vmatpush1.xpose.msra.mxu0 0.0
      %553 = vmatprep.subr.mxu0 0.0
      %554 = vmatpush1.xpose.msra.mxu0 0.0
      %555 = vmatprep.subr.mxu0 0.0
      %556 = vmatpush1.xpose.msra.mxu0 0.0
      %557 = vmatprep.subr.mxu0 0.0
      %558 = vmatpush1.xpose.msra.mxu0 0.0
      %559 = vmatprep.subr.mxu0 0.0
      %560 = vmatpush1.xpose.msra.mxu0 0.0
      %561 = vmatprep.subr.mxu0 0.0
      %562 = vmatpush1.xpose.msra.mxu0 0.0
      %563 = vmatprep.subr.mxu0 0.0
      %564 = vmatpush1.xpose.msra.mxu0 0.0
      %565 = vmatprep.subr.mxu0 0.0
      %566 = vmatpush1.xpose.msra.mxu0 0.0
      %567 = vmatprep.subr.mxu0 0.0
      %568 = vmatpush1.xpose.msra.mxu0 0.0
      %569 = vmatprep.subr.mxu0 0.0
      %570 = vmatpush1.xpose.msra.mxu0 0.0
      %571 = vmatprep.mubr.f32.mxu0 0.0
      %572 = vmatmul.mubr.f32.gmra.mrb[0].mxu0 %v490
      %v573 = vpop.f32.mrb[0].mxu0
      %v574 = vadd.f32 0.0, %v573
      %v575 = vpop.f32.mrb[0].mxu0
      %576 = vmatprep.mubr.f32.mxu0 0.0
      %577 = vmatmul.mubr.f32.gmra.mrb[0].mxu0 %v493
      %v578 = vpop.f32.mrb[0].mxu0
      %v579 = vadd.f32 0.0, %v578
      %v580 = vpop.f32.mrb[0].mxu0
      %581 = vmatprep.mubr.f32.mxu0 0.0
      %582 = vmatmul.mubr.f32.gmra.mrb[0].mxu0 %v496
      %v583 = vpop.f32.mrb[0].mxu0
      %v584 = vadd.f32 0.0, %v583
      %v585 = vpop.f32.mrb[0].mxu0
      %586 = vmatprep.mubr.f32.mxu0 0.0
      %587 = vmatmul.mubr.f32.gmra.mrb[0].mxu0 %v499
      %v588 = vpop.f32.mrb[0].mxu0
      %v589 = vadd.f32 0.0, %v588
      %v590 = vpop.f32.mrb[0].mxu0
      %591 = vdwg.mxu0
      %v592 = vstv %s199
      %v593 = vmul.f32 %v592, %v574
      %v594 = vmul.f32 %v592, %v579
      %v595 = vmul.f32 %v592, %v584
      %v596 = vmul.f32 %v592, %v589
      %v597 = vadd.f32 %v593, %v210
      %v598 = vadd.f32 %v594, %v211
      %v599 = vadd.f32 %v595, %v212
      %v600 = vadd.f32 %v596, %v213
      %601 = vst.msk [vmem:[%s198] sm:$0xff] %vm464, %v597
      %602 = vst.msk [vmem:[%s198 + $0x8] sm:$0xff] %vm464, %v598
      %603 = vst.msk [vmem:[%s198 + $0x10] sm:$0xff] %vm464, %v599
      %604 = vst.msk [vmem:[%s198 + $0x18] sm:$0xff] %vm464, %v600
      %p605 = scmp.lt.s32.totalorder %s16, 1
      %s606 = scalar_select %p605, %s16, 1
      %s607 = smul.addr %s606, 4
      %s608 = smul.addr %s607, 8
      %s609 = scalar_lea.vmem %s4, %s608
      // Predicated region
      $region37: #{module_self_attention.1} parent=35 // pred_check
        %p610 = pneg %p123
      $region38: #{module_self_attention.1} parent=35 // pred_check_branch
        %612 = sbr.rel (%p610) target = $region40
      $region39: #{module_self_attention.1} parent=35 // pred_region
        _
      $region40: #{module_self_attention.1} parent=35 // pred_fallthru
        _
    $region36: #{module_self_attention.1} parent=5 // pred_fallthru
      _
    %p613 = scmp.le.s32.totalorder 2, %s11
    // Predicated region
    $region41: #{module_self_attention.1} parent=5 // pred_check
      %p614 = pneg %p613
    $region42: #{module_self_attention.1} parent=5 // pred_check_branch
      %616 = sbr.rel (%p614) target = $region44
    $region43: #{module_self_attention.1} parent=5 // pred_region
      %s617 = ssub.s32 %s11, 2
      // Predicated region
      $region45: #{module_self_attention.1} parent=43 // pred_check
        %p618 = pneg %p129
      $region46: #{module_self_attention.1} parent=43 // pred_check_branch
        %620 = sbr.rel (%p618) target = $region48
      $region47: #{module_self_attention.1} parent=43 // pred_region
        %p621 = scmp.lt.s32.totalorder %s17, 1
        %s622 = scalar_select %p621, %s17, 1
        %s623 = smul.addr %s622, 4
        %s624 = smul.addr %s623, 8
        %s625 = scalar_lea.vmem %s4, %s624
      $region48: #{module_self_attention.1} parent=43 // pred_fallthru
        _
    $region44: #{module_self_attention.1} parent=5 // pred_fallthru
      _
  $region6: #{module_self_attention.1} parent=0 // loop_footer
    %s15 = sadd.s32 1, %s11
  $region7: #{module_self_attention.1} parent=0 // loop_footer_branch
    %10 = sbr.rel target = $region3
  $region8: #{module_self_attention.1} parent=0 // loop_exit
    _

</llo_original>
